<compile_context>
chip_gen: v7x
topology: tpu7x:2x2x1
jax: 0.10.0
libtpu: 0.0.40
codegen_flags: <defaults>
</compile_context>

<pallas_src>
import functools

import jax
import jax.numpy as jnp
from jax import lax
from jax.experimental import pallas as pl
from jax.experimental.pallas import tpu as pltpu


def _round_up(x, m):
    return ((x + m - 1) // m) * m


# --------------------------- Pallas kernels ---------------------------------

def _x_moment_kernel(x_ref, sum_ref, gram_ref):
    """Accumulate per-column sums and the Gram matrix X^T X of the packed input.

    Batch-norm statistics of the deconv output y = x @ W follow exactly from
    these two tiny reductions (colsum(y) = colsum(x) @ W and
    colssq(y) = diag(W^T (X^T X) W)), so this pass never materializes the
    K2-wide output: it is a pure HBM-bound read of x with a small MXU update.
    """
    @pl.when(pl.program_id(1) == 0)
    def _():
        sum_ref[...] = jnp.zeros_like(sum_ref)
        gram_ref[...] = jnp.zeros_like(gram_ref)

    x = x_ref[...]                                          # (tm, PC) f32
    sum_ref[...] += jnp.sum(x, axis=0, keepdims=True)[None]
    # X^T X: small (PC, PC) accumulator, contraction over the big row tile.
    gram_ref[...] += jnp.dot(x.T, x,
                             preferred_element_type=jnp.float32)[None]


def _deconv_bn_act_kernel(x_ref, w_ref, scale_ref, shift_ref, o_ref, *,
                          apply_relu):
    # Recompute the cheap Cin-contraction matmul (x is 8x smaller than y, so
    # recomputing beats writing y and re-reading it), fuse BN affine + ReLU.
    y = jnp.dot(x_ref[...], w_ref[...], preferred_element_type=jnp.float32)
    out = y * scale_ref[...] + shift_ref[...]
    if apply_relu:
        out = jnp.maximum(out, 0.0)
    o_ref[...] = out


# --------------------------- Wrapper -----------------------------------------

def deconvolution_layer_forward(x_nchw, weight, bias, gamma, beta, *,
                                stride, eps=1e-5, apply_relu=True,
                                row_tile=4096, n_split=2):
    """ConvTranspose2d(kernel=stride, padding=0) -> BatchNorm2d(batch stats) -> ReLU.

    `bias` is accepted for API parity but not applied: a per-channel conv bias
    is exactly cancelled by batch-norm with batch statistics.
    """
    # TODO(synk): general stride != kernel_size / padding / output_padding paths,
    # group/instance-norm variants and eval-mode (running-stats) BN are not
    # implemented; this is the batch_norm training-mode fast path of the module.
    del bias
    N, Cin, H, W = x_nchw.shape
    Cin_w, Cout, kH, kW = weight.shape
    assert Cin_w == Cin and kH == stride and kW == stride, \
        "fast path assumes kernel_size == stride and padding == 0"
    Hout, Wout = H * kH, W * kW
    K2 = Cout * kH * kW

    # Pack P rows per matmul row so the output lane dimension is P*K2 (=128 here).
    P = max(1, 128 // K2) if K2 <= 128 else 1
    PC = P * Cin
    PK2 = P * K2

    # ---- layout: NCHW -> (rows, Cin); zero-pad; pack P rows per matmul row ---
    x2d = jnp.transpose(x_nchw, (0, 2, 3, 1)).reshape(N * H * W, Cin)
    x2d = x2d.astype(jnp.float32)
    R1 = N * H * W                           # one row per input spatial location
    Rp = -(-R1 // P)                         # packed rows

    tm = max(8, min(row_tile, _round_up(Rp, 8)))
    tiles_total = -(-Rp // tm)
    n_split = max(1, min(n_split, tiles_total))   # no useless padding for tiny inputs
    tiles_per_core = -(-tiles_total // n_split)
    Rp_pad = n_split * tiles_per_core * tm
    rows_pad = Rp_pad * P

    x_pad = jnp.pad(x2d, ((0, rows_pad - R1), (0, 0)))   # zero rows: no stat impact
    xP = x_pad.reshape(Rp_pad, PC)

    # Block-diagonal weight: column index = p*K2 + c*kH*kW + (a*kW + b).
    w2d = weight.reshape(Cin, K2).astype(jnp.float32)
    wP = jnp.kron(jnp.eye(P, dtype=jnp.float32), w2d)    # (PC, PK2)

    vmem_params = dict(vmem_limit_bytes=32 * 1024 * 1024)  # safe on v7x (64 MiB phys)

    # ---- pass 1: colsum(x) + Gram(X) fused reduction (HBM-read bound) --------
    stats_cost = pl.CostEstimate(
        flops=2 * Rp_pad * PC * PC + Rp_pad * PC,
        transcendentals=0,
        bytes_accessed=xP.size * 4 + n_split * (PC + PC * PC) * 4)

    sum_p, gram_p = pl.pallas_call(
        _x_moment_kernel,
        out_shape=(jax.ShapeDtypeStruct((n_split, 1, PC), jnp.float32),
                   jax.ShapeDtypeStruct((n_split, PC, PC), jnp.float32)),
        grid_spec=pltpu.PrefetchScalarGridSpec(
            num_scalar_prefetch=0,
            grid=(n_split, tiles_per_core),
            in_specs=[
                pl.BlockSpec((tm, PC),
                             lambda c, i: (c * tiles_per_core + i, 0)),
            ],
            out_specs=[
                pl.BlockSpec((1, 1, PC), lambda c, i: (c, 0, 0)),
                pl.BlockSpec((1, PC, PC), lambda c, i: (c, 0, 0)),
            ],
        ),
        compiler_params=pltpu.CompilerParams(
            dimension_semantics=("parallel", "arbitrary"), **vmem_params),
        cost_estimate=stats_cost,
    )(xP)

    # ---- fold partials into per-channel BN scale/shift (tiny XLA math) ------
    count = float(N * Hout * Wout)
    s_ci = sum_p.reshape(n_split * P, Cin).sum(axis=0)          # (Cin,)
    gram_full = gram_p.sum(axis=0)                              # (PC, PC)
    # True Gram = sum of the P diagonal (Cin, Cin) blocks of the packed Gram.
    G = sum(gram_full[p * Cin:(p + 1) * Cin, p * Cin:(p + 1) * Cin]
            for p in range(P))                                  # (Cin, Cin)
    col_sum = s_ci @ w2d                                        # (K2,)
    col_ssq = jnp.einsum('ij,ik,jk->k', G, w2d, w2d)            # (K2,)
    ch_sum = col_sum.reshape(Cout, kH * kW).sum(axis=1)
    ch_ssq = col_ssq.reshape(Cout, kH * kW).sum(axis=1)
    mean = ch_sum / count
    var = jnp.maximum(ch_ssq / count - mean * mean, 0.0)        # clamp E[y^2]-E[y]^2
    scale_c = gamma.astype(jnp.float32) * lax.rsqrt(var + eps)
    shift_c = beta.astype(jnp.float32) - mean * scale_c
    scale_cols = jnp.tile(jnp.repeat(scale_c, kH * kW), P).reshape(1, PK2)
    shift_cols = jnp.tile(jnp.repeat(shift_c, kH * kW), P).reshape(1, PK2)
    # TODO(synk): PyTorch BatchNorm2d training also updates running_mean/var
    # (with unbiased variance); expose `mean`/`var` to the caller if needed.

    # ---- pass 2: deconv-matmul fused with BN affine + ReLU (lane-dense out) --
    bn_cost = pl.CostEstimate(
        flops=2 * Rp_pad * PC * PK2 + 3 * Rp_pad * PK2,
        transcendentals=0,
        bytes_accessed=(xP.size * 4 + wP.size * 4 + 2 * PK2 * 4
                        + Rp_pad * PK2 * 4))

    outP = pl.pallas_call(
        functools.partial(_deconv_bn_act_kernel, apply_relu=apply_relu),
        out_shape=jax.ShapeDtypeStruct((Rp_pad, PK2), jnp.float32),
        grid_spec=pltpu.PrefetchScalarGridSpec(
            num_scalar_prefetch=0,
            grid=(n_split * tiles_per_core,),
            in_specs=[
                pl.BlockSpec((tm, PC), lambda i: (i, 0)),
                pl.BlockSpec((PC, PK2), lambda i: (0, 0)),
                pl.BlockSpec((1, PK2), lambda i: (0, 0)),
                pl.BlockSpec((1, PK2), lambda i: (0, 0)),
            ],
            out_specs=pl.BlockSpec((tm, PK2), lambda i: (i, 0)),
        ),
        compiler_params=pltpu.CompilerParams(
            dimension_semantics=("parallel",), **vmem_params),
        cost_estimate=bn_cost,
    )(xP, wP, scale_cols, shift_cols)

    # ---- single final transpose: (rows, Cout, kH, kW) -> NCHW ----------------
    # TODO(synk): this XLA transpose is the one remaining full-size HBM round
    # trip; emitting NCHW directly from pass 2 needs lane-interleaved (w*k+b)
    # stores that BlockSpec cannot express without sub-128 masked writes.
    out_flat = outP.reshape(rows_pad, K2)[:R1]
    out = out_flat.reshape(N, H, W, Cout, kH, kW)
    out = jnp.transpose(out, (0, 3, 1, 4, 2, 5)).reshape(N, Cout, Hout, Wout)
    return out


# --------------------------- Demo / check ------------------------------------

if __name__ == "__main__":
    key = jax.random.PRNGKey(0)
    kx, kw, kb = jax.random.split(key, 3)

    N, Cin, H, W = 2, 4, 16, 16
    Cout, k = 8, 2          # kernel_size == stride == 2, padding = 0

    x = jax.random.normal(kx, (N, Cin, H, W), jnp.float32)
    # ConvTranspose2d weight layout: (in_channels, out_channels, kH, kW)
    weight = jax.random.normal(kw, (Cin, Cout, k, k), jnp.float32) * 0.1
    bias = jax.random.normal(kb, (Cout,), jnp.float32) * 0.1
    gamma = jnp.ones((Cout,), jnp.float32)   # BatchNorm affine init
    beta = jnp.zeros((Cout,), jnp.float32)

    out = deconvolution_layer_forward(
        x, weight, bias, gamma, beta, stride=k, eps=1e-5, apply_relu=True)
    out = jax.block_until_ready(out)

    # Pure-JAX reference (bias included; it cancels exactly inside batch norm).
    y_ref = jnp.einsum("ncij,coab->noiajb", x, weight).reshape(
        N, Cout, H * k, W * k) + bias[None, :, None, None]
    m = y_ref.mean(axis=(0, 2, 3), keepdims=True)
    v = y_ref.var(axis=(0, 2, 3), keepdims=True)
    ref = jnp.maximum((y_ref - m) / jnp.sqrt(v + 1e-5), 0.0)

    assert out.shape == (N, Cout, H * k, W * k)
    assert bool(jnp.allclose(out, ref, atol=2e-3, rtol=2e-3))
    print("KERNEL_OK")
</pallas_src>

<mosaic_0001>
module attributes {stable_mosaic.version = 11 : i64} {
  func.func @_x_moment_kernel(%arg0: i32, %arg1: i32, %arg2: memref<128x16xf32, #tpu.memory_space<vmem>>, %arg3: memref<1x1x16xf32, #tpu.memory_space<vmem>>, %arg4: memref<1x16x16xf32, #tpu.memory_space<vmem>>) attributes {dimension_semantics = [#tpu.dimension_semantics<parallel>, #tpu.dimension_semantics<arbitrary>], iteration_bounds = array<i64: 1, 1>, scalar_prefetch = 0 : i64, scratch_operands = 0 : i64, tpu.core_type = #tpu.core_type<tc>, window_params = [{transform_indices = @transform_0, window_bounds = array<i64: 128, 16>}, {transform_indices = @transform_1, window_bounds = array<i64: 1, 1, 16>}, {transform_indices = @transform_2, window_bounds = array<i64: 1, 16, 16>}]} {
    %c0_i32 = arith.constant 0 : i32
    %0 = arith.cmpi eq, %arg1, %c0_i32 : i32
    %1 = arith.extui %0 : i1 to i32
    %c0_i32_0 = arith.constant 0 : i32
    %2 = arith.cmpi ne, %1, %c0_i32_0 : i32
    scf.if %2 {
      %cst_15 = arith.constant 0.000000e+00 : f32
      %16 = vector.broadcast %cst_15 : f32 to vector<1x1x16xf32>
      %c0_16 = arith.constant 0 : index
      %c0_17 = arith.constant 0 : index
      %c0_18 = arith.constant 0 : index
      %17 = vector.load %arg3[%c0_16, %c0_17, %c0_18] : memref<1x1x16xf32, #tpu.memory_space<vmem>>, vector<1x1x16xf32>
      tpu.vector_store %arg3[%c0_16, %c0_17, %c0_18], %16 {strides = array<i32>} : memref<1x1x16xf32, #tpu.memory_space<vmem>>, vector<1x1x16xf32>,
      %cst_19 = arith.constant 0.000000e+00 : f32
      %18 = vector.broadcast %cst_19 : f32 to vector<1x16x16xf32>
      %c0_20 = arith.constant 0 : index
      %c0_21 = arith.constant 0 : index
      %c0_22 = arith.constant 0 : index
      %19 = vector.load %arg4[%c0_20, %c0_21, %c0_22] : memref<1x16x16xf32, #tpu.memory_space<vmem>>, vector<1x16x16xf32>
      tpu.vector_store %arg4[%c0_20, %c0_21, %c0_22], %18 {strides = array<i32>} : memref<1x16x16xf32, #tpu.memory_space<vmem>>, vector<1x16x16xf32>,
    } else {
    }
    %c0 = arith.constant 0 : index
    %c0_1 = arith.constant 0 : index
    %3 = vector.load %arg2[%c0, %c0_1] : memref<128x16xf32, #tpu.memory_space<vmem>>, vector<128x16xf32>
    %c0_2 = arith.constant 0 : index
    %c0_3 = arith.constant 0 : index
    %c0_4 = arith.constant 0 : index
    %4 = vector.load %arg3[%c0_2, %c0_3, %c0_4] : memref<1x1x16xf32, #tpu.memory_space<vmem>>, vector<1x1x16xf32>
    %cst = arith.constant dense<0.000000e+00> : vector<16xf32>
    %5 = vector.multi_reduction <add>, %3, %cst [0] : vector<128x16xf32> to vector<16xf32>
    %6 = vector.shape_cast %5 : vector<16xf32> to vector<1x16xf32>
    %7 = vector.shape_cast %6 : vector<1x16xf32> to vector<1x1x16xf32>
    %8 = arith.addf %4, %7 : vector<1x1x16xf32>
    %c0_5 = arith.constant 0 : index
    %c0_6 = arith.constant 0 : index
    %c0_7 = arith.constant 0 : index
    %9 = vector.load %arg3[%c0_5, %c0_6, %c0_7] : memref<1x1x16xf32, #tpu.memory_space<vmem>>, vector<1x1x16xf32>
    tpu.vector_store %arg3[%c0_5, %c0_6, %c0_7], %8 {strides = array<i32>} : memref<1x1x16xf32, #tpu.memory_space<vmem>>, vector<1x1x16xf32>,
    %c0_8 = arith.constant 0 : index
    %c0_9 = arith.constant 0 : index
    %c0_10 = arith.constant 0 : index
    %10 = vector.load %arg4[%c0_8, %c0_9, %c0_10] : memref<1x16x16xf32, #tpu.memory_space<vmem>>, vector<1x16x16xf32>
    %11 = tpu.transpose %3, [1, 0] : vector<128x16xf32> -> vector<16x128xf32>
    %cst_11 = arith.constant dense<0.000000e+00> : vector<16x16xf32>
    %12 = tpu.matmul %11, %3, %cst_11 {dimension_numbers = #tpu.dot_dimension_numbers<[1], [0], [0], [1], [0, 0, 1, 1], [], []>} : vector<16x128xf32>, vector<128x16xf32>, vector<16x16xf32> -> vector<16x16xf32>
    %13 = vector.shape_cast %12 : vector<16x16xf32> to vector<1x16x16xf32>
    %14 = arith.addf %10, %13 : vector<1x16x16xf32>
    %c0_12 = arith.constant 0 : index
    %c0_13 = arith.constant 0 : index
    %c0_14 = arith.constant 0 : index
    %15 = vector.load %arg4[%c0_12, %c0_13, %c0_14] : memref<1x16x16xf32, #tpu.memory_space<vmem>>, vector<1x16x16xf32>
    tpu.vector_store %arg4[%c0_12, %c0_13, %c0_14], %14 {strides = array<i32>} : memref<1x16x16xf32, #tpu.memory_space<vmem>>, vector<1x16x16xf32>,
    return
  }
  func.func @transform_0(%arg0: i32, %arg1: i32) -> (i32, i32) {
    %c1_i32 = arith.constant 1 : i32
    %0 = arith.muli %arg0, %c1_i32 : i32
    %1 = arith.addi %0, %arg1 : i32
    %c0_i32 = arith.constant 0 : i32
    %c0_i32_0 = arith.constant 0 : i32
    return %1, %c0_i32 : i32, i32
  }
  func.func @transform_1(%arg0: i32, %arg1: i32) -> (i32, i32, i32) {
    %c0_i32 = arith.constant 0 : i32
    %c0_i32_0 = arith.constant 0 : i32
    %c0_i32_1 = arith.constant 0 : i32
    return %arg0, %c0_i32, %c0_i32_0 : i32, i32, i32
  }
  func.func @transform_2(%arg0: i32, %arg1: i32) -> (i32, i32, i32) {
    %c0_i32 = arith.constant 0 : i32
    %c0_i32_0 = arith.constant 0 : i32
    %c0_i32_1 = arith.constant 0 : i32
    return %arg0, %c0_i32, %c0_i32_0 : i32, i32, i32
  }
}

</mosaic_0001>

<llo_original>
// kernel: tpu_custom_call.1
$region0: #{tpu_custom_call.1}
  #allocation0 [shape = 'u32[]', space=smem, size = 0x4, offset = 0x4, fixed_abs, tag = 'smem constant byte address 0x4 - core index']
  #allocation1 [shape = 'u32[144,128]{1,0:T(1,128)}', space=vmem, size = 0x12000, scoped, tag = 'internal scratch']
  %s0 = inlined_call_operand.vmem [shape: f32[128,16], index: 0, kind: input, shape index: {}]
  %s1 = inlined_call_operand.hbm [shape: f32[1,1,16], index: 1, kind: output, shape index: {0}]
  %s2 = inlined_call_operand.hbm [shape: f32[1,16,16], index: 2, kind: output, shape index: {1}]
  %3 = xla_tuple %s1, %s2
  %s4 = sld [smem:[#allocation0]]
  $region26: #{tpu_custom_call.1} parent=0
    _
  %s6 = ssub.s32 1, %s4
  %s7 = scalar_select 0, %s6, %s4
  $region1: #{tpu_custom_call.1} parent=0
    #allocation2 [shape = 'u8[512]{0}', space=vmem, size = 0x400, scoped, tag = 'output window, operand 0, single buffered']
    #allocation3 [shape = 's32[1]{0}', space=sflag, size = 0x4, scoped, tag = 'scoped memory for tpu_custom_call.1']
    #allocation4 [shape = 'u8[8192]{0}', space=vmem, size = 0x2000, scoped, tag = 'output window, operand 1, single buffered']
    #allocation5 [shape = 's32[1]{0}', space=sflag, size = 0x4, scoped, tag = 'scoped memory for tpu_custom_call.1']
    %8 = vsyncpa [#allocation3], 0
    %9 = vsyncpa [#allocation5], 0
    // Predicated region
    $region2: #{tpu_custom_call.1} parent=1 // pred_check
      _
    $region3: #{tpu_custom_call.1} parent=1 // pred_check_branch
      %11 = sbr.rel (0) target = $region5
    $region4: #{tpu_custom_call.1} parent=1 // pred_region
      %s12 = sadd.s32 0, 0
      %s13 = smul.u32 16, %s12
      %p14 = scmp.lt.s32.totalorder %s13, 15
      %s15 = scalar_select %p14, %s13, 15
      %s16 = smul.addr %s15, 8
      %s17 = scalar_lea.vmem %s0, %s16
      %s18 = sadd.s32 0, 0
      %s19 = smul.u32 16, %s18
    $region5: #{tpu_custom_call.1} parent=1 // pred_fallthru
      _
    %s20 = sadd.s32 0, 0
    %s21 = smul.u32 16, %s20
    %p22 = scmp.lt.s32.totalorder %s21, 15
    %s23 = scalar_select %p22, %s21, 15
    %s24 = smul.addr %s23, 8
    %s25 = scalar_lea.vmem %s0, %s24
    %s26 = sadd.s32 0, 0
    %s27 = smul.u32 16, %s26
    %p28 = scmp.lt.s32.totalorder %s27, 15
    %s29 = scalar_select %p28, %s27, 15
    %s30 = smul.addr %s29, 8
    %s31 = scalar_lea.vmem %s0, %s30
    %s32 = sadd.s32 0, 0
    %s33 = smul.u32 16, %s32
    %p34 = scmp.eq.s32.totalorder 0, 0
    // Predicated region
    $region6: #{tpu_custom_call.1} parent=1 // pred_check
      %p35 = pneg %p34
    $region7: #{tpu_custom_call.1} parent=1 // pred_check_branch
      %37 = sbr.rel (%p35) target = $region9
    $region8: #{tpu_custom_call.1} parent=1 // pred_region
      %vm38 = vcmask 122880
      %39 = vst.msk [vmem:[#allocation2] sm:$0x1] %vm38, 0.0
      %vm40 = vcmask 130048
      %41 = vst.msk [vmem:[#allocation4] sm:$0xff] %vm40, 0.0
      %42 = vst.msk [vmem:[#allocation4 + $0x8] sm:$0xff] %vm40, 0.0
    $region9: #{tpu_custom_call.1} parent=1 // pred_fallthru
      _
    %v43 = vld [vmem:[%s31] sm:$0xff]
    %v44 = vld [vmem:[%s31 + $0x8] sm:$0xff]
    %v45 = vld [vmem:[%s31 + $0x10] sm:$0xff]
    %v46 = vld [vmem:[%s31 + $0x18] sm:$0xff]
    %v47 = vld [vmem:[%s31 + $0x20] sm:$0xff]
    %v48 = vld [vmem:[%s31 + $0x28] sm:$0xff]
    %v49 = vld [vmem:[%s31 + $0x30] sm:$0xff]
    %v50 = vld [vmem:[%s31 + $0x38] sm:$0xff]
    %v51 = vld [vmem:[%s31 + $0x40] sm:$0xff]
    %v52 = vld [vmem:[%s31 + $0x48] sm:$0xff]
    %v53 = vld [vmem:[%s31 + $0x50] sm:$0xff]
    %v54 = vld [vmem:[%s31 + $0x58] sm:$0xff]
    %v55 = vld [vmem:[%s31 + $0x60] sm:$0xff]
    %v56 = vld [vmem:[%s31 + $0x68] sm:$0xff]
    %v57 = vld [vmem:[%s31 + $0x70] sm:$0xff]
    %v58 = vld [vmem:[%s31 + $0x78] sm:$0xff]
    %v59 = vld [vmem:[#allocation2] sm:$0x1]
    %vm60 = vcmask 130048
    %v61 = vsel %vm60, %v43, 0.0
    %v62 = vsel %vm60, %v44, 0.0
    %v63 = vadd.f32 %v61, %v62
    %v64 = vsel %vm60, %v45, 0.0
    %v65 = vadd.f32 %v63, %v64
    %v66 = vsel %vm60, %v46, 0.0
    %v67 = vadd.f32 %v65, %v66
    %v68 = vsel %vm60, %v47, 0.0
    %v69 = vadd.f32 %v67, %v68
    %v70 = vsel %vm60, %v48, 0.0
    %v71 = vadd.f32 %v69, %v70
    %v72 = vsel %vm60, %v49, 0.0
    %v73 = vadd.f32 %v71, %v72
    %v74 = vsel %vm60, %v50, 0.0
    %v75 = vadd.f32 %v73, %v74
    %v76 = vsel %vm60, %v51, 0.0
    %v77 = vadd.f32 %v75, %v76
    %v78 = vsel %vm60, %v52, 0.0
    %v79 = vadd.f32 %v77, %v78
    %v80 = vsel %vm60, %v53, 0.0
    %v81 = vadd.f32 %v79, %v80
    %v82 = vsel %vm60, %v54, 0.0
    %v83 = vadd.f32 %v81, %v82
    %v84 = vsel %vm60, %v55, 0.0
    %v85 = vadd.f32 %v83, %v84
    %v86 = vsel %vm60, %v56, 0.0
    %v87 = vadd.f32 %v85, %v86
    %v88 = vsel %vm60, %v57, 0.0
    %v89 = vadd.f32 %v87, %v88
    %v90 = vsel %vm60, %v58, 0.0
    %v91 = vadd.f32 %v89, %v90
    %v92 = vrot.slane %v91, 4
    %v93 = vadd.f32 %v91, %v92
    %v94 = vrot.slane %v93, 2
    %v95 = vadd.f32 %v93, %v94
    %v96 = vrot.slane %v95, 1
    %v97 = vadd.f32 %v95, %v96
    %v98 = vadd.f32 %v59, %v97
    %vm99 = vcmask 122880
    %100 = vst.msk [vmem:[#allocation2] sm:$0x1] %vm99, %v98
    %v101 = vld [vmem:[#allocation4] sm:$0xff]
    %v102 = vld [vmem:[#allocation4 + $0x8] sm:$0xff]
    %103 = vxpose.xlu0.b32.start [1/16] %v43, 128
    %104 = vxpose.xlu0.b32.cont [2/16] %v44, 128
    %105 = vxpose.xlu0.b32.cont [3/16] %v45, 128
    %106 = vxpose.xlu0.b32.cont [4/16] %v46, 128
    %107 = vxpose.xlu0.b32.cont [5/16] %v47, 128
    %108 = vxpose.xlu0.b32.cont [6/16] %v48, 128
    %109 = vxpose.xlu0.b32.cont [7/16] %v49, 128
    %110 = vxpose.xlu0.b32.cont [8/16] %v50, 128
    %111 = vxpose.xlu0.b32.cont [9/16] %v51, 128
    %112 = vxpose.xlu0.b32.cont [10/16] %v52, 128
    %113 = vxpose.xlu0.b32.cont [11/16] %v53, 128
    %114 = vxpose.xlu0.b32.cont [12/16] %v54, 128
    %115 = vxpose.xlu0.b32.cont [13/16] %v55, 128
    %116 = vxpose.xlu0.b32.cont [14/16] %v56, 128
    %117 = vxpose.xlu0.b32.cont [15/16] %v57, 128
    %118 = vxpose.xlu0.b32.end [16/16] %v58, 128
    %v119 = vpop.trf.xlu0
    %v120 = vpop.trf.xlu0
    %v121 = vpop.trf.xlu0
    %v122 = vpop.trf.xlu0
    %v123 = vpop.trf.xlu0
    %v124 = vpop.trf.xlu0
    %v125 = vpop.trf.xlu0
    %v126 = vpop.trf.xlu0
    %v127 = vpop.trf.xlu0
    %v128 = vpop.trf.xlu0
    %v129 = vpop.trf.xlu0
    %v130 = vpop.trf.xlu0
    %v131 = vpop.trf.xlu0
    %v132 = vpop.trf.xlu0
    %v133 = vpop.trf.xlu0
    %v134 = vpop.trf.xlu0
    %135 = vmatprep.subr.mxu0 0.0
    %136 = vmatpush1.msra.mxu0 %v43
    %137 = vmatprep.subr.mxu0 0.0
    %138 = vmatpush1.msra.mxu0 %v44
    %139 = vmatprep.subr.mxu0 0.0
    %140 = vmatpush1.msra.mxu0 %v45
    %141 = vmatprep.subr.mxu0 0.0
    %142 = vmatpush1.msra.mxu0 %v46
    %143 = vmatprep.subr.mxu0 0.0
    %144 = vmatpush1.msra.mxu0 %v47
    %145 = vmatprep.subr.mxu0 0.0
    %146 = vmatpush1.msra.mxu0 %v48
    %147 = vmatprep.subr.mxu0 0.0
    %148 = vmatpush1.msra.mxu0 %v49
    %149 = vmatprep.subr.mxu0 0.0
    %150 = vmatpush1.msra.mxu0 %v50
    %151 = vmatprep.subr.mxu0 0.0
    %152 = vmatpush1.msra.mxu0 %v51
    %153 = vmatprep.subr.mxu0 0.0
    %154 = vmatpush1.msra.mxu0 %v52
    %155 = vmatprep.subr.mxu0 0.0
    %156 = vmatpush1.msra.mxu0 %v53
    %157 = vmatprep.subr.mxu0 0.0
    %158 = vmatpush1.msra.mxu0 %v54
    %159 = vmatprep.subr.mxu0 0.0
    %160 = vmatpush1.msra.mxu0 %v55
    %161 = vmatprep.subr.mxu0 0.0
    %162 = vmatpush1.msra.mxu0 %v56
    %163 = vmatprep.subr.mxu0 0.0
    %164 = vmatpush1.msra.mxu0 %v57
    %165 = vmatprep.subr.mxu0 0.0
    %166 = vmatpush1.msra.mxu0 %v58
    %167 = vmatprep.subr.mxu0 0.0
    %168 = vmatpush1.msra.mxu0 0.0
    %169 = vmatprep.subr.mxu0 0.0
    %170 = vmatpush1.msra.mxu0 0.0
    %171 = vmatprep.subr.mxu0 0.0
    %172 = vmatpush1.msra.mxu0 0.0
    %173 = vmatprep.subr.mxu0 0.0
    %174 = vmatpush1.msra.mxu0 0.0
    %175 = vmatprep.subr.mxu0 0.0
    %176 = vmatpush1.msra.mxu0 0.0
    %177 = vmatprep.subr.mxu0 0.0
    %178 = vmatpush1.msra.mxu0 0.0
    %179 = vmatprep.subr.mxu0 0.0
    %180 = vmatpush1.msra.mxu0 0.0
    %181 = vmatprep.subr.mxu0 0.0
    %182 = vmatpush1.msra.mxu0 0.0
    %183 = vmatprep.subr.mxu0 0.0
    %184 = vmatpush1.msra.mxu0 0.0
    %185 = vmatprep.subr.mxu0 0.0
    %186 = vmatpush1.msra.mxu0 0.0
    %187 = vmatprep.subr.mxu0 0.0
    %188 = vmatpush1.msra.mxu0 0.0
    %189 = vmatprep.subr.mxu0 0.0
    %190 = vmatpush1.msra.mxu0 0.0
    %191 = vmatprep.subr.mxu0 0.0
    %192 = vmatpush1.msra.mxu0 0.0
    %193 = vmatprep.subr.mxu0 0.0
    %194 = vmatpush1.msra.mxu0 0.0
    %195 = vmatprep.subr.mxu0 0.0
    %196 = vmatpush1.msra.mxu0 0.0
    %197 = vmatprep.subr.mxu0 0.0
    %198 = vmatpush1.msra.mxu0 0.0
    %199 = vmatprep.mubr.f32.mxu0 0.0
    %200 = vmatmul.mubr.f32.gmra.mrb[0].mxu0 %v119
    %v201 = vpop.f32.mrb[0].mxu0
    %v202 = vadd.f32 0.0, %v201
    %v203 = vpop.f32.mrb[0].mxu0
    %204 = vmatprep.mubr.f32.mxu0 0.0
    %205 = vmatmul.mubr.f32.gmra.mrb[0].mxu0 %v120
    %v206 = vpop.f32.mrb[0].mxu0
    %v207 = vadd.f32 0.0, %v206
    %v208 = vpop.f32.mrb[0].mxu0
    %209 = vdwg.mxu0
    %v210 = vadd.f32 %v101, %v202
    %v211 = vadd.f32 %v102, %v207
    %212 = vst.msk [vmem:[#allocation4] sm:$0xff] %vm60, %v210
    %213 = vst.msk [vmem:[#allocation4 + $0x8] sm:$0xff] %vm60, %v211
    // Predicated region
    $region10: #{tpu_custom_call.1} parent=1 // pred_check
      _
    $region11: #{tpu_custom_call.1} parent=1 // pred_check_branch
      %215 = sbr.rel (0) target = $region13
    $region12: #{tpu_custom_call.1} parent=1 // pred_region
      %s217 = ssub.s32 16, 16
      %218 = vsyncadd [#allocation3], %s217
      %s220 = sshll.u32 [#allocation2], 4
      %s221 = int_to_ptr.vmem [resolvable:$true] %s220
      %223 = dma.vmem_to_hbm [thread:$0]  %s221, 16, %s1, [#allocation3]
    $region13: #{tpu_custom_call.1} parent=1 // pred_fallthru
      _
    // Predicated region
    $region14: #{tpu_custom_call.1} parent=1 // pred_check
      _
    $region15: #{tpu_custom_call.1} parent=1 // pred_check_branch
      %225 = sbr.rel (0) target = $region17
    $region16: #{tpu_custom_call.1} parent=1 // pred_region
      %s227 = ssub.s32 256, 256
      %228 = vsyncadd [#allocation5], %s227
      %s229 = sshll.u32 [#allocation4], 4
      %s230 = int_to_ptr.vmem [resolvable:$true] %s229
      %235 = dma.vmem_to_hbm [thread:$0]  %s230, 256, %s2, [#allocation5], 128, 128, 8
    $region17: #{tpu_custom_call.1} parent=1 // pred_fallthru
      _
    // Predicated region
    $region18: #{tpu_custom_call.1} parent=1 // pred_check
      _
    $region19: #{tpu_custom_call.1} parent=1 // pred_check_branch
      %237 = sbr.rel (0) target = $region21
    $region20: #{tpu_custom_call.1} parent=1 // pred_region
      %238 = dma.done [#allocation3], 16
    $region21: #{tpu_custom_call.1} parent=1 // pred_fallthru
      _
    // Predicated region
    $region22: #{tpu_custom_call.1} parent=1 // pred_check
      _
    $region23: #{tpu_custom_call.1} parent=1 // pred_check_branch
      %240 = sbr.rel (0) target = $region25
    $region24: #{tpu_custom_call.1} parent=1 // pred_region
      %241 = dma.done [#allocation5], 256
    $region25: #{tpu_custom_call.1} parent=1 // pred_fallthru
      _
    %242 = vsyncpa [#allocation3], 1
    %243 = vsyncpa [#allocation5], 1

</llo_original>
